<compile_context>
chip_gen: v5e
topology: v5e:2x2
jax: 0.10.0
libtpu: 0.0.40
codegen_flags: <defaults>
</compile_context>

<pallas_src>
import functools
import math

import jax
import jax.numpy as jnp
from jax.experimental import pallas as pl
from jax.experimental.pallas import tpu as pltpu

LANE = 128


def _lane_fold(x, lanes):
    """Sum lane-blocks of x:(R, k*lanes) down to (R, lanes) using only static,
    lane-aligned vreg adds (pure VALU, no XLU cross-lane reduce)."""
    k = x.shape[-1] // lanes
    carry = None
    while k > 1:
        if k % 2 == 1:
            blk = x[:, (k - 1) * lanes: k * lanes]
            carry = blk if carry is None else carry + blk
            k -= 1
        half = k // 2
        x = x[:, : half * lanes] + x[:, half * lanes: k * lanes]
        k = half
    if carry is not None:
        x = x + carry
    return x


def _bce_dice_kernel(inp_ref, tgt_ref, bce_out, pt_out, den_out,
                     bce_acc, pt_acc, den_acc,
                     *, m_row, tm, nk_per_g, needs_mask, binary_targets, lanes):
    g = pl.program_id(0)
    k = pl.program_id(1)

    @pl.when(k == 0)
    def _init():
        bce_acc[...] = jnp.zeros_like(bce_acc)
        pt_acc[...] = jnp.zeros_like(pt_acc)
        den_acc[...] = jnp.zeros_like(den_acc)

    p_raw = inp_ref[...].astype(jnp.float32)   # (NR, tm) probabilities
    t_raw = tgt_ref[...].astype(jnp.float32)   # (NR, tm) targets

    def accumulate(p, t):
        if binary_targets:
            # Single transcendental per element: EUP is the binding unit.
            q = jnp.where(t > 0.5, p, 1.0 - p)
            bce_elem = -jnp.maximum(jnp.log(q), -100.0)
            den_elem = p * p + t                      # t*t == t for binary targets
        else:
            # Exact nn.BCELoss soft-label semantics (two logs, clamped at -100).
            log_p = jnp.maximum(jnp.log(p), -100.0)
            log_1mp = jnp.maximum(jnp.log(1.0 - p), -100.0)
            bce_elem = -(t * log_p + (1.0 - t) * log_1mp)
            den_elem = p * p + t * t
        # TODO(synk): optional bf16 EUP log path for v6e/v7x (needs accuracy validation near 0/1).
        bce_acc[...] += _lane_fold(bce_elem, lanes)
        pt_acc[...] += _lane_fold(p * t, lanes)
        den_acc[...] += _lane_fold(den_elem, lanes)

    if needs_mask:
        gk = g * nk_per_g + k            # unclamped global tile index
        start = gk * tm
        is_full = (start + tm) <= m_row

        @pl.when(is_full)
        def _fast():                      # unmasked fast path for fully valid tiles
            accumulate(p_raw, t_raw)

        @pl.when(jnp.logical_not(is_full))
        def _masked():
            # Ragged trailing tile or clamped overflow-duplicate tile: zeroed elements
            # contribute exactly 0 to BCE (via the -100 log clamp) and to the dice sums.
            col = jax.lax.broadcasted_iota(jnp.int32, p_raw.shape, dimension=1)
            valid = (start + col) < m_row
            accumulate(jnp.where(valid, p_raw, 0.0), jnp.where(valid, t_raw, 0.0))
    else:
        accumulate(p_raw, t_raw)

    @pl.when(k == nk_per_g - 1)
    def _finalize():
        bce_out[...] = bce_acc[...]
        pt_out[...] = pt_acc[...]
        den_out[...] = den_acc[...]


def bce_dice_prob_loss(inp, tgt, alpha, beta, *, block_elems=None, eps=1e-6,
                       binary_targets=False):
    """inp, tgt: (N, C, spatial...) arrays; inp holds probabilities in [0, 1].
    Set binary_targets=True only when targets are strictly {0, 1} (halves EUP work)."""
    N, C = int(inp.shape[0]), int(inp.shape[1])
    M = 1
    for s in inp.shape[2:]:
        M *= int(s)
    NC = N * C

    # Sublane folding: if N*C is not a multiple of 8, fold a factor F of the spatial dim into the
    # row dim so every (8,128) vreg is fully occupied (free row-major reshape).
    F = 1
    if NC % 8 != 0:
        cand = 8 // math.gcd(NC, 8)
        if cand > 1 and M % cand == 0:
            F = cand
    NR = NC * F
    m_row = M // F

    # Free reshape (no transpose / no copy); inputs stream in their native dtype.
    x = inp.reshape(NR, m_row)
    y = tgt.reshape(NR, m_row)

    if block_elems is None:
        block_elems = 512 * 1024                     # ~2 MiB f32 per input block
    tm = max(LANE, (block_elems // max(NR, 1)) // LANE * LANE)
    if m_row >= LANE:
        tm = min(tm, (m_row // LANE) * LANE)         # lane-aligned, never larger than m_row
    else:
        tm = m_row                                   # tiny spatial dim: single full block
    lanes = min(tm, LANE)

    nk_total = pl.cdiv(m_row, tm)
    # Two independent reduction groups whenever there is more than one tile, so both v7x
    # TensorCores stream (odd tile counts: clamp + mask the overflow duplicate tile).
    G = 2 if nk_total >= 2 else 1
    nk_per_g = pl.cdiv(nk_total, G)
    needs_mask = (m_row % tm != 0) or (G * nk_per_g != nk_total)

    # Double-buffered working-set budget check (2 inputs x 2 buffers per block).
    block_bytes = NR * tm * (x.dtype.itemsize + y.dtype.itemsize) * 2
    if block_bytes > 24 * 1024 * 1024:
        # TODO(synk): tile the N*C row dimension with an additional grid axis for huge N*C.
        raise ValueError(
            f"N*C={NC} too large for a single row block "
            f"({block_bytes / 2**20:.1f} MiB double-buffered working set)")

    kernel = functools.partial(
        _bce_dice_kernel, m_row=m_row, tm=tm, nk_per_g=nk_per_g,
        needs_mask=needs_mask, binary_targets=binary_targets, lanes=lanes)

    last_blk = nk_total - 1
    in_spec = pl.BlockSpec(
        (NR, tm), lambda g, k: (0, jnp.minimum(g * nk_per_g + k, last_blk)))
    part_shape = jax.ShapeDtypeStruct((G, NR, lanes), jnp.float32)
    part_spec = pl.BlockSpec((None, NR, lanes), lambda g, k: (g, 0, 0))

    bce_p, pt_p, den_p = pl.pallas_call(
        kernel,
        out_shape=(part_shape, part_shape, part_shape),
        grid_spec=pltpu.PrefetchScalarGridSpec(
            num_scalar_prefetch=0,
            grid=(G, nk_per_g),
            in_specs=[in_spec, in_spec],
            out_specs=(part_spec, part_spec, part_spec),
            scratch_shapes=[
                pltpu.VMEM((NR, lanes), jnp.float32),   # BCE lane-wise partial sums
                pltpu.VMEM((NR, lanes), jnp.float32),   # sum(p*t) lane-wise partial sums
                pltpu.VMEM((NR, lanes), jnp.float32),   # sum(p*p)+sum(t*t) lane-wise partial sums
            ],
        ),
        compiler_params=pltpu.CompilerParams(
            dimension_semantics=("parallel", "arbitrary"),
            vmem_limit_bytes=32 * 1024 * 1024,
        ),
    )(x, y)

    # Tiny epilogue: single cross-lane / cross-group / per-channel combine.
    bce_sum = jnp.sum(bce_p)
    pt_rows = jnp.sum(pt_p, axis=(0, 2))                      # (NR,)
    den_rows = jnp.sum(den_p, axis=(0, 2))                    # (NR,)
    pt_c = jnp.sum(pt_rows.reshape(N, C, F), axis=(0, 2))     # (C,)
    den_c = jnp.sum(den_rows.reshape(N, C, F), axis=(0, 2))   # (C,)

    bce = bce_sum / jnp.float32(N * C * M)
    per_channel_dice = 2.0 * pt_c / jnp.maximum(den_c, eps)
    dice_loss = 1.0 - jnp.mean(per_channel_dice)
    return alpha * bce + beta * dice_loss


def _reference(inp, tgt, alpha, beta, eps=1e-6):
    # Pure-JAX reference matching pytorch3dunet's BCE + DiceLoss(normalization='none').
    p = inp.astype(jnp.float32)
    t = tgt.astype(jnp.float32)
    log_p = jnp.maximum(jnp.log(p), -100.0)
    log_1mp = jnp.maximum(jnp.log(1.0 - p), -100.0)
    bce = jnp.mean(-(t * log_p + (1.0 - t) * log_1mp))
    C = p.shape[1]
    pf = jnp.moveaxis(p, 1, 0).reshape(C, -1)
    tf = jnp.moveaxis(t, 1, 0).reshape(C, -1)
    intersect = jnp.sum(pf * tf, axis=-1)
    denom = jnp.sum(pf * pf, axis=-1) + jnp.sum(tf * tf, axis=-1)
    dice = 1.0 - jnp.mean(2.0 * intersect / jnp.maximum(denom, eps))
    return alpha * bce + beta * dice


if __name__ == "__main__":
    alpha, beta = 0.5, 0.5  # module hyper-parameters (deterministic)

    def run_case(seed, shape, *, block_elems=None, binary_targets=True,
                 soft_targets=False, target_dtype=jnp.float32):
        k1, k2 = jax.random.split(jax.random.PRNGKey(seed))
        inp = jax.random.uniform(k1, shape, jnp.float32, minval=1e-4, maxval=1.0 - 1e-4)
        if soft_targets:
            tgt = jax.random.uniform(k2, shape, jnp.float32)
        else:
            tgt = (jax.random.uniform(k2, shape, jnp.float32) > 0.5).astype(target_dtype)
        loss = jax.block_until_ready(
            bce_dice_prob_loss(inp, tgt, alpha, beta, block_elems=block_elems,
                               binary_targets=binary_targets))
        ref = jax.block_until_ready(_reference(inp, tgt, alpha, beta))
        assert jnp.allclose(loss, ref, rtol=1e-5, atol=1e-5), (shape, loss, ref)

    # 1) Spec shape (N, C, H, W) = (2, 4, 16, 16): single tile, single-log fast path.
    run_case(0, (2, 4, 16, 16))
    # 2) Multi-tile even split: 2-group parallel reduction, unmasked fast path only.
    run_case(1, (2, 4, 64, 64), block_elems=4096)
    # 3) Ragged spatial size: masked trailing tile, BCE divided by the true element count.
    run_case(2, (2, 4, 16, 13), block_elems=2048)
    # 4) Odd tile count: G=2 with clamped, fully-masked overflow-duplicate tile.
    run_case(3, (2, 4, 24, 16), block_elems=1024)
    # 5) Small N*C (=3): sublane folding (F=8) restores full vreg occupancy.
    run_case(4, (1, 3, 64, 64), block_elems=3072)
    # 6) Soft labels: exact two-log nn.BCELoss path (binary_targets=False).
    run_case(5, (2, 4, 16, 16), binary_targets=False, soft_targets=True)
    # 7) bf16 targets streamed in native dtype (halves target HBM traffic; cast in-kernel).
    run_case(6, (2, 4, 32, 32), target_dtype=jnp.bfloat16)

    print("KERNEL_OK")
</pallas_src>

<mosaic_0001>
module attributes {stable_mosaic.version = 11 : i64} {
  func.func @_bce_dice_kernel(%arg0: i32, %arg1: i32, %arg2: memref<8x256xf32, #tpu.memory_space<vmem>>, %arg3: memref<8x256xf32, #tpu.memory_space<vmem>>, %arg4: memref<1x8x128xf32, #tpu.memory_space<vmem>>, %arg5: memref<1x8x128xf32, #tpu.memory_space<vmem>>, %arg6: memref<1x8x128xf32, #tpu.memory_space<vmem>>, %arg7: memref<8x128xf32, #tpu.memory_space<vmem>>, %arg8: memref<8x128xf32, #tpu.memory_space<vmem>>, %arg9: memref<8x128xf32, #tpu.memory_space<vmem>>) attributes {dimension_semantics = [#tpu.dimension_semantics<parallel>, #tpu.dimension_semantics<arbitrary>], iteration_bounds = array<i64: 1, 1>, scalar_prefetch = 0 : i64, scratch_operands = 3 : i64, tpu.core_type = #tpu.core_type<tc>, window_params = [{transform_indices = @transform_0, window_bounds = array<i64: 8, 256>}, {transform_indices = @transform_1, window_bounds = array<i64: 8, 256>}, {transform_indices = @transform_2, window_bounds = array<i64: 1, 8, 128>}, {transform_indices = @transform_3, window_bounds = array<i64: 1, 8, 128>}, {transform_indices = @transform_4, window_bounds = array<i64: 1, 8, 128>}]} {
    %c0_i32 = arith.constant 0 : i32
    %0 = arith.cmpi eq, %arg1, %c0_i32 : i32
    %1 = arith.extui %0 : i1 to i32
    %c0_i32_0 = arith.constant 0 : i32
    %2 = arith.cmpi ne, %1, %c0_i32_0 : i32
    scf.if %2 {
      %cst_21 = arith.constant 0.000000e+00 : f32
      %39 = vector.broadcast %cst_21 : f32 to vector<8x128xf32>
      %c0_22 = arith.constant 0 : index
      %c0_23 = arith.constant 0 : index
      %40 = vector.load %arg7[%c0_22, %c0_23] : memref<8x128xf32, #tpu.memory_space<vmem>>, vector<8x128xf32>
      tpu.vector_store %arg7[%c0_22, %c0_23], %39 {strides = array<i32>} : memref<8x128xf32, #tpu.memory_space<vmem>>, vector<8x128xf32>,
      %cst_24 = arith.constant 0.000000e+00 : f32
      %41 = vector.broadcast %cst_24 : f32 to vector<8x128xf32>
      %c0_25 = arith.constant 0 : index
      %c0_26 = arith.constant 0 : index
      %42 = vector.load %arg8[%c0_25, %c0_26] : memref<8x128xf32, #tpu.memory_space<vmem>>, vector<8x128xf32>
      tpu.vector_store %arg8[%c0_25, %c0_26], %41 {strides = array<i32>} : memref<8x128xf32, #tpu.memory_space<vmem>>, vector<8x128xf32>,
      %cst_27 = arith.constant 0.000000e+00 : f32
      %43 = vector.broadcast %cst_27 : f32 to vector<8x128xf32>
      %c0_28 = arith.constant 0 : index
      %c0_29 = arith.constant 0 : index
      %44 = vector.load %arg9[%c0_28, %c0_29] : memref<8x128xf32, #tpu.memory_space<vmem>>, vector<8x128xf32>
      tpu.vector_store %arg9[%c0_28, %c0_29], %43 {strides = array<i32>} : memref<8x128xf32, #tpu.memory_space<vmem>>, vector<8x128xf32>,
    } else {
    }
    %c0 = arith.constant 0 : index
    %c0_1 = arith.constant 0 : index
    %3 = vector.load %arg2[%c0, %c0_1] : memref<8x256xf32, #tpu.memory_space<vmem>>, vector<8x256xf32>
    %c0_2 = arith.constant 0 : index
    %c0_3 = arith.constant 0 : index
    %4 = vector.load %arg3[%c0_2, %c0_3] : memref<8x256xf32, #tpu.memory_space<vmem>>, vector<8x256xf32>
    %cst = arith.constant 5.000000e-01 : f32
    %5 = vector.broadcast %cst : f32 to vector<8x256xf32>
    %6 = arith.cmpf ogt, %4, %5 : vector<8x256xf32>
    %cst_4 = arith.constant 1.000000e+00 : f32
    %7 = vector.broadcast %cst_4 : f32 to vector<8x256xf32>
    %8 = arith.subf %7, %3 : vector<8x256xf32>
    %9 = arith.select %6, %3, %8 : vector<8x256xi1>, vector<8x256xf32>
    %10 = math.log %9 : vector<8x256xf32>
    %cst_5 = arith.constant -1.000000e+02 : f32
    %11 = vector.broadcast %cst_5 : f32 to vector<8x256xf32>
    %12 = arith.maximumf %10, %11 : vector<8x256xf32>
    %cst_6 = arith.constant 0.000000e+00 : f32
    %13 = vector.broadcast %cst_6 : f32 to vector<8x256xf32>
    %14 = arith.subf %13, %12 : vector<8x256xf32>
    %15 = arith.mulf %3, %3 : vector<8x256xf32>
    %16 = arith.addf %15, %4 : vector<8x256xf32>
    %c0_7 = arith.constant 0 : index
    %c0_8 = arith.constant 0 : index
    %17 = vector.load %arg7[%c0_7, %c0_8] : memref<8x128xf32, #tpu.memory_space<vmem>>, vector<8x128xf32>
    %18 = vector.extract_strided_slice %14 {offsets = [0, 0], sizes = [8, 128], strides = [1, 1]} : vector<8x256xf32> to vector<8x128xf32>
    %19 = vector.extract_strided_slice %14 {offsets = [0, 128], sizes = [8, 128], strides = [1, 1]} : vector<8x256xf32> to vector<8x128xf32>
    %20 = arith.addf %18, %19 : vector<8x128xf32>
    %21 = arith.addf %17, %20 : vector<8x128xf32>
    %c0_9 = arith.constant 0 : index
    %c0_10 = arith.constant 0 : index
    %22 = vector.load %arg7[%c0_9, %c0_10] : memref<8x128xf32, #tpu.memory_space<vmem>>, vector<8x128xf32>
    tpu.vector_store %arg7[%c0_9, %c0_10], %21 {strides = array<i32>} : memref<8x128xf32, #tpu.memory_space<vmem>>, vector<8x128xf32>,
    %c0_11 = arith.constant 0 : index
    %c0_12 = arith.constant 0 : index
    %23 = vector.load %arg8[%c0_11, %c0_12] : memref<8x128xf32, #tpu.memory_space<vmem>>, vector<8x128xf32>
    %24 = arith.mulf %3, %4 : vector<8x256xf32>
    %25 = vector.extract_strided_slice %24 {offsets = [0, 0], sizes = [8, 128], strides = [1, 1]} : vector<8x256xf32> to vector<8x128xf32>
    %26 = vector.extract_strided_slice %24 {offsets = [0, 128], sizes = [8, 128], strides = [1, 1]} : vector<8x256xf32> to vector<8x128xf32>
    %27 = arith.addf %25, %26 : vector<8x128xf32>
    %28 = arith.addf %23, %27 : vector<8x128xf32>
    %c0_13 = arith.constant 0 : index
    %c0_14 = arith.constant 0 : index
    %29 = vector.load %arg8[%c0_13, %c0_14] : memref<8x128xf32, #tpu.memory_space<vmem>>, vector<8x128xf32>
    tpu.vector_store %arg8[%c0_13, %c0_14], %28 {strides = array<i32>} : memref<8x128xf32, #tpu.memory_space<vmem>>, vector<8x128xf32>,
    %c0_15 = arith.constant 0 : index
    %c0_16 = arith.constant 0 : index
    %30 = vector.load %arg9[%c0_15, %c0_16] : memref<8x128xf32, #tpu.memory_space<vmem>>, vector<8x128xf32>
    %31 = vector.extract_strided_slice %16 {offsets = [0, 0], sizes = [8, 128], strides = [1, 1]} : vector<8x256xf32> to vector<8x128xf32>
    %32 = vector.extract_strided_slice %16 {offsets = [0, 128], sizes = [8, 128], strides = [1, 1]} : vector<8x256xf32> to vector<8x128xf32>
    %33 = arith.addf %31, %32 : vector<8x128xf32>
    %34 = arith.addf %30, %33 : vector<8x128xf32>
    %c0_17 = arith.constant 0 : index
    %c0_18 = arith.constant 0 : index
    %35 = vector.load %arg9[%c0_17, %c0_18] : memref<8x128xf32, #tpu.memory_space<vmem>>, vector<8x128xf32>
    tpu.vector_store %arg9[%c0_17, %c0_18], %34 {strides = array<i32>} : memref<8x128xf32, #tpu.memory_space<vmem>>, vector<8x128xf32>,
    %c0_i32_19 = arith.constant 0 : i32
    %36 = arith.cmpi eq, %arg1, %c0_i32_19 : i32
    %37 = arith.extui %36 : i1 to i32
    %c0_i32_20 = arith.constant 0 : i32
    %38 = arith.cmpi ne, %37, %c0_i32_20 : i32
    scf.if %38 {
      %c0_21 = arith.constant 0 : index
      %c0_22 = arith.constant 0 : index
      %39 = vector.load %arg7[%c0_21, %c0_22] : memref<8x128xf32, #tpu.memory_space<vmem>>, vector<8x128xf32>
      %c0_23 = arith.constant 0 : index
      %c0_24 = arith.constant 0 : index
      %c0_25 = arith.constant 0 : index
      %40 = vector.load %arg4[%c0_23, %c0_24, %c0_25] : memref<1x8x128xf32, #tpu.memory_space<vmem>>, vector<1x8x128xf32>
      %41 = vector.shape_cast %40 : vector<1x8x128xf32> to vector<8x128xf32>
      %42 = vector.shape_cast %39 : vector<8x128xf32> to vector<1x8x128xf32>
      tpu.vector_store %arg4[%c0_23, %c0_24, %c0_25], %42 {strides = array<i32>} : memref<1x8x128xf32, #tpu.memory_space<vmem>>, vector<1x8x128xf32>,
      %c0_26 = arith.constant 0 : index
      %c0_27 = arith.constant 0 : index
      %43 = vector.load %arg8[%c0_26, %c0_27] : memref<8x128xf32, #tpu.memory_space<vmem>>, vector<8x128xf32>
      %c0_28 = arith.constant 0 : index
      %c0_29 = arith.constant 0 : index
      %c0_30 = arith.constant 0 : index
      %44 = vector.load %arg5[%c0_28, %c0_29, %c0_30] : memref<1x8x128xf32, #tpu.memory_space<vmem>>, vector<1x8x128xf32>
      %45 = vector.shape_cast %44 : vector<1x8x128xf32> to vector<8x128xf32>
      %46 = vector.shape_cast %43 : vector<8x128xf32> to vector<1x8x128xf32>
      tpu.vector_store %arg5[%c0_28, %c0_29, %c0_30], %46 {strides = array<i32>} : memref<1x8x128xf32, #tpu.memory_space<vmem>>, vector<1x8x128xf32>,
      %c0_31 = arith.constant 0 : index
      %c0_32 = arith.constant 0 : index
      %47 = vector.load %arg9[%c0_31, %c0_32] : memref<8x128xf32, #tpu.memory_space<vmem>>, vector<8x128xf32>
      %c0_33 = arith.constant 0 : index
      %c0_34 = arith.constant 0 : index
      %c0_35 = arith.constant 0 : index
      %48 = vector.load %arg6[%c0_33, %c0_34, %c0_35] : memref<1x8x128xf32, #tpu.memory_space<vmem>>, vector<1x8x128xf32>
      %49 = vector.shape_cast %48 : vector<1x8x128xf32> to vector<8x128xf32>
      %50 = vector.shape_cast %47 : vector<8x128xf32> to vector<1x8x128xf32>
      tpu.vector_store %arg6[%c0_33, %c0_34, %c0_35], %50 {strides = array<i32>} : memref<1x8x128xf32, #tpu.memory_space<vmem>>, vector<1x8x128xf32>,
    } else {
    }
    return
  }
  func.func @transform_0(%arg0: i32, %arg1: i32) -> (i32, i32) {
    %c1_i32 = arith.constant 1 : i32
    %0 = arith.muli %arg0, %c1_i32 : i32
    %1 = arith.addi %0, %arg1 : i32
    %c0_i32 = arith.constant 0 : i32
    %2 = arith.minsi %1, %c0_i32 : i32
    %c0_i32_0 = arith.constant 0 : i32
    %c0_i32_1 = arith.constant 0 : i32
    return %c0_i32_0, %2 : i32, i32
  }
  func.func @transform_1(%arg0: i32, %arg1: i32) -> (i32, i32) {
    %c1_i32 = arith.constant 1 : i32
    %0 = arith.muli %arg0, %c1_i32 : i32
    %1 = arith.addi %0, %arg1 : i32
    %c0_i32 = arith.constant 0 : i32
    %2 = arith.minsi %1, %c0_i32 : i32
    %c0_i32_0 = arith.constant 0 : i32
    %c0_i32_1 = arith.constant 0 : i32
    return %c0_i32_0, %2 : i32, i32
  }
  func.func @transform_2(%arg0: i32, %arg1: i32) -> (i32, i32, i32) {
    %c0_i32 = arith.constant 0 : i32
    %c0_i32_0 = arith.constant 0 : i32
    %c0_i32_1 = arith.constant 0 : i32
    return %arg0, %c0_i32, %c0_i32_0 : i32, i32, i32
  }
  func.func @transform_3(%arg0: i32, %arg1: i32) -> (i32, i32, i32) {
    %c0_i32 = arith.constant 0 : i32
    %c0_i32_0 = arith.constant 0 : i32
    %c0_i32_1 = arith.constant 0 : i32
    return %arg0, %c0_i32, %c0_i32_0 : i32, i32, i32
  }
  func.func @transform_4(%arg0: i32, %arg1: i32) -> (i32, i32, i32) {
    %c0_i32 = arith.constant 0 : i32
    %c0_i32_0 = arith.constant 0 : i32
    %c0_i32_1 = arith.constant 0 : i32
    return %arg0, %c0_i32, %c0_i32_0 : i32, i32, i32
  }
}

</mosaic_0001>

<llo_original>
// kernel: tpu_custom_call.1
$region0: #{tpu_custom_call.1}
  #allocation0 [shape = 'u32[]', space=smem, size = 0x4, offset = 0x4, fixed_abs, tag = 'smem constant byte address 0x4 - core index']
  #allocation1 [shape = 'u32[72,128]{1,0:T(1,128)}', space=vmem, size = 0x9000, scoped, tag = 'internal scratch']
  #allocation2 [shape = 'f32[8,128]{1,0:T(8,128)}', space=vmem, size = 0x1000, scoped, tag = 'scratch operand']
  #allocation3 [shape = 'f32[8,128]{1,0:T(8,128)}', space=vmem, size = 0x1000, scoped, tag = 'scratch operand']
  #allocation4 [shape = 'f32[8,128]{1,0:T(8,128)}', space=vmem, size = 0x1000, scoped, tag = 'scratch operand']
  %s0 = inlined_call_operand.hbm [shape: f32[8,256], index: 0, kind: input, shape index: {}]
  %s1 = inlined_call_operand.hbm [shape: f32[8,256], index: 1, kind: input, shape index: {}]
  %s2 = inlined_call_operand.hbm [shape: f32[1,8,128], index: 2, kind: output, shape index: {0}]
  %s3 = inlined_call_operand.hbm [shape: f32[1,8,128], index: 3, kind: output, shape index: {1}]
  %s4 = inlined_call_operand.hbm [shape: f32[1,8,128], index: 4, kind: output, shape index: {2}]
  %5 = xla_tuple %s2, %s3, %s4
  %s6 = sld [smem:[#allocation0]]
  $region50: #{tpu_custom_call.1} parent=0
    _
  %s8 = ssub.s32 1, %s6
  %s9 = scalar_select 0, %s8, %s6
  $region1: #{tpu_custom_call.1} parent=0
    #allocation5 [shape = 'u8[8192]{0}', space=vmem, size = 0x2000, scoped, tag = 'input window, operand 0, single buffered']
    #allocation6 [shape = 's32[1]{0}', space=sflag, size = 0x4, scoped, tag = 'scoped memory for tpu_custom_call.1']
    #allocation7 [shape = 's32[1]{0}', space=sflag, size = 0x4, scoped, tag = 'scoped memory for tpu_custom_call.1']
    #allocation8 [shape = 'u8[8192]{0}', space=vmem, size = 0x2000, scoped, tag = 'input window, operand 1, single buffered']
    #allocation9 [shape = 's32[1]{0}', space=sflag, size = 0x4, scoped, tag = 'scoped memory for tpu_custom_call.1']
    #allocation10 [shape = 'u8[4096]{0}', space=vmem, size = 0x1000, scoped, tag = 'output window, operand 0, single buffered']
    #allocation11 [shape = 'u8[4096]{0}', space=vmem, size = 0x1000, scoped, tag = 'output window, operand 1, single buffered']
    #allocation12 [shape = 's32[1]{0}', space=sflag, size = 0x4, scoped, tag = 'scoped memory for tpu_custom_call.1']
    #allocation13 [shape = 'u8[4096]{0}', space=vmem, size = 0x1000, scoped, tag = 'output window, operand 2, single buffered']
    %10 = vsyncpa [#allocation6], 0
    %11 = vsyncpa [#allocation9], 0
    %12 = vsyncpa [#allocation7], 0
    %13 = vsyncpa [#allocation12], 0
    // Predicated region
    $region2: #{tpu_custom_call.1} parent=1 // pred_check
      _
    $region3: #{tpu_custom_call.1} parent=1 // pred_check_branch
      %15 = sbr.rel (0) target = $region5
    $region4: #{tpu_custom_call.1} parent=1 // pred_region
      %s16 = sadd.s32 0, 0
      %p17 = scmp.lt.s32.totalorder %s16, 0
      %s18 = scalar_select %p17, %s16, 0
      %s19 = smul.u32 2, %s18
      %21 = vsyncadd [#allocation6], 0
      %s22 = smul.addr %s19, 8
      %s23 = scalar_lea.hbm %s0, %s22
      %s25 = sshll.u32 %s23, 4
      %s26 = int_to_ptr.hbm [resolvable:$true] %s25
      %s27 = sshll.u32 [#allocation5], 4
      %s28 = int_to_ptr.vmem [resolvable:$true] %s27
      %30 = dma.hbm_to_vmem [thread:$0]  %s26, 256, %s28, [#allocation6]
    $region5: #{tpu_custom_call.1} parent=1 // pred_fallthru
      _
    // Predicated region
    $region6: #{tpu_custom_call.1} parent=1 // pred_check
      _
    $region7: #{tpu_custom_call.1} parent=1 // pred_check_branch
      %32 = sbr.rel (0) target = $region9
    $region8: #{tpu_custom_call.1} parent=1 // pred_region
      %s33 = sadd.s32 0, 0
      %p34 = scmp.lt.s32.totalorder %s33, 0
      %s35 = scalar_select %p34, %s33, 0
      %s36 = smul.u32 2, %s35
      %38 = vsyncadd [#allocation9], 0
      %s39 = smul.addr %s36, 8
      %s40 = scalar_lea.hbm %s1, %s39
      %s42 = sshll.u32 %s40, 4
      %s43 = int_to_ptr.hbm [resolvable:$true] %s42
      %s44 = sshll.u32 [#allocation8], 4
      %s45 = int_to_ptr.vmem [resolvable:$true] %s44
      %47 = dma.hbm_to_vmem [thread:$0]  %s43, 256, %s45, [#allocation9]
    $region9: #{tpu_custom_call.1} parent=1 // pred_fallthru
      _
    // Predicated region
    $region10: #{tpu_custom_call.1} parent=1 // pred_check
      _
    $region11: #{tpu_custom_call.1} parent=1 // pred_check_branch
      %49 = sbr.rel (0) target = $region13
    $region12: #{tpu_custom_call.1} parent=1 // pred_region
      %51 = dma.done [#allocation6], 256
    $region13: #{tpu_custom_call.1} parent=1 // pred_fallthru
      _
    // Predicated region
    $region14: #{tpu_custom_call.1} parent=1 // pred_check
      _
    $region15: #{tpu_custom_call.1} parent=1 // pred_check_branch
      %53 = sbr.rel (0) target = $region17
    $region16: #{tpu_custom_call.1} parent=1 // pred_region
      %55 = dma.done [#allocation9], 256
    $region17: #{tpu_custom_call.1} parent=1 // pred_fallthru
      _
    %s56 = sadd.s32 0, 0
    %p57 = scmp.lt.s32.totalorder %s56, 0
    %s58 = scalar_select %p57, %s56, 0
    %s59 = smul.u32 2, %s58
    %s60 = sadd.s32 0, 0
    %p61 = scmp.lt.s32.totalorder %s60, 0
    %s62 = scalar_select %p61, %s60, 0
    %s63 = smul.u32 2, %s62
    %p64 = scmp.eq.s32.totalorder 0, 0
    // Predicated region
    $region18: #{tpu_custom_call.1} parent=1 // pred_check
      %p65 = pneg %p64
    $region19: #{tpu_custom_call.1} parent=1 // pred_check_branch
      %67 = sbr.rel (%p65) target = $region21
    $region20: #{tpu_custom_call.1} parent=1 // pred_region
      %68 = vst [vmem:[#allocation2] sm:$0xff] 0.0
      %69 = vst [vmem:[#allocation3] sm:$0xff] 0.0
      %70 = vst [vmem:[#allocation4] sm:$0xff] 0.0
    $region21: #{tpu_custom_call.1} parent=1 // pred_fallthru
      _
    %v71 = vld [vmem:[#allocation5] sm:$0xff]
    %v72 = vld [vmem:[#allocation5 + $0x8] sm:$0xff]
    %v73 = vld [vmem:[#allocation8] sm:$0xff]
    %v74 = vld [vmem:[#allocation8 + $0x8] sm:$0xff]
    %vm75 = vcmp.gt.f32.partialorder %v73, 0.5
    %vm76 = vcmp.gt.f32.partialorder %v74, 0.5
    %v77 = vsub.f32 1.0, %v71
    %v78 = vsub.f32 1.0, %v72
    %v79 = vsel %vm75, %v71, %v77
    %v80 = vsel %vm76, %v72, %v78
    %v81 = vlog2.pop %v79
    %v82 = vmul.f32 %v81, 0.6931472
    %v83 = vlog2.pop %v80
    %v84 = vmul.f32 %v83, 0.6931472
    %v85 = vmax.f32 %v82, -100.0
    %v86 = vmax.f32 %v84, -100.0
    %v87 = vsub.f32 0.0, %v85
    %v88 = vsub.f32 0.0, %v86
    %v89 = vmul.f32 %v71, %v71
    %v90 = vmul.f32 %v72, %v72
    %v91 = vadd.f32 %v89, %v73
    %v92 = vadd.f32 %v90, %v74
    %v93 = vld [vmem:[#allocation2] sm:$0xff]
    %v94 = vadd.f32 %v87, %v88
    %v95 = vadd.f32 %v93, %v94
    %96 = vst [vmem:[#allocation2] sm:$0xff] %v95
    %v97 = vld [vmem:[#allocation3] sm:$0xff]
    %v98 = vmul.f32 %v71, %v73
    %v99 = vmul.f32 %v72, %v74
    %v100 = vadd.f32 %v98, %v99
    %v101 = vadd.f32 %v97, %v100
    %102 = vst [vmem:[#allocation3] sm:$0xff] %v101
    %v103 = vld [vmem:[#allocation4] sm:$0xff]
    %v104 = vadd.f32 %v91, %v92
    %v105 = vadd.f32 %v103, %v104
    %106 = vst [vmem:[#allocation4] sm:$0xff] %v105
    // Predicated region
    $region22: #{tpu_custom_call.1} parent=1 // pred_check
      %p107 = pneg %p64
    $region23: #{tpu_custom_call.1} parent=1 // pred_check_branch
      %109 = sbr.rel (%p107) target = $region25
    $region24: #{tpu_custom_call.1} parent=1 // pred_region
      %v110 = vld [vmem:[#allocation2] sm:$0xff]
      %111 = vst [vmem:[#allocation10] sm:$0xff] %v110
      %v112 = vld [vmem:[#allocation3] sm:$0xff]
      %113 = vst [vmem:[#allocation11] sm:$0xff] %v112
      %v114 = vld [vmem:[#allocation4] sm:$0xff]
      %115 = vst [vmem:[#allocation13] sm:$0xff] %v114
    $region25: #{tpu_custom_call.1} parent=1 // pred_fallthru
      _
    // Predicated region
    $region26: #{tpu_custom_call.1} parent=1 // pred_check
      _
    $region27: #{tpu_custom_call.1} parent=1 // pred_check_branch
      %117 = sbr.rel (0) target = $region29
    $region28: #{tpu_custom_call.1} parent=1 // pred_region
      %119 = vsyncadd [#allocation7], 0
      %s121 = sshll.u32 [#allocation10], 4
      %s122 = int_to_ptr.vmem [resolvable:$true] %s121
      %s123 = sshll.u32 %s2, 4
      %s124 = int_to_ptr.hbm [resolvable:$true] %s123
      %126 = dma.vmem_to_hbm [thread:$0]  %s122, 128, %s124, [#allocation7]
    $region29: #{tpu_custom_call.1} parent=1 // pred_fallthru
      _
    // Predicated region
    $region30: #{tpu_custom_call.1} parent=1 // pred_check
      _
    $region31: #{tpu_custom_call.1} parent=1 // pred_check_branch
      %128 = sbr.rel (0) target = $region33
    $region32: #{tpu_custom_call.1} parent=1 // pred_region
      %130 = vsyncadd [#allocation12], 0
      %s132 = sshll.u32 [#allocation11], 4
      %s133 = int_to_ptr.vmem [resolvable:$true] %s132
      %s134 = sshll.u32 %s3, 4
      %s135 = int_to_ptr.hbm [resolvable:$true] %s134
      %137 = dma.vmem_to_hbm [thread:$0]  %s133, 128, %s135, [#allocation12]
    $region33: #{tpu_custom_call.1} parent=1 // pred_fallthru
      _
    // Predicated region
    $region34: #{tpu_custom_call.1} parent=1 // pred_check
      _
    $region35: #{tpu_custom_call.1} parent=1 // pred_check_branch
      %139 = sbr.rel (0) target = $region37
    $region36: #{tpu_custom_call.1} parent=1 // pred_region
      %141 = vsyncadd [#allocation12], 0
      %s143 = sshll.u32 [#allocation13], 4
      %s144 = int_to_ptr.vmem [resolvable:$true] %s143
      %s145 = sshll.u32 %s4, 4
      %s146 = int_to_ptr.hbm [resolvable:$true] %s145
      %148 = dma.vmem_to_hbm [thread:$0]  %s144, 128, %s146, [#allocation12]
    $region37: #{tpu_custom_call.1} parent=1 // pred_fallthru
      _
    // Predicated region
    $region38: #{tpu_custom_call.1} parent=1 // pred_check
      _
    $region39: #{tpu_custom_call.1} parent=1 // pred_check_branch
      %150 = sbr.rel (0) target = $region41
    $region40: #{tpu_custom_call.1} parent=1 // pred_region
      %152 = dma.done [#allocation7], 128
    $region41: #{tpu_custom_call.1} parent=1 // pred_fallthru
      _
    // Predicated region
    $region42: #{tpu_custom_call.1} parent=1 // pred_check
      _
    $region43: #{tpu_custom_call.1} parent=1 // pred_check_branch
      %154 = sbr.rel (0) target = $region45
    $region44: #{tpu_custom_call.1} parent=1 // pred_region
      %156 = dma.done [#allocation12], 128
    $region45: #{tpu_custom_call.1} parent=1 // pred_fallthru
      _
    // Predicated region
    $region46: #{tpu_custom_call.1} parent=1 // pred_check
      _
    $region47: #{tpu_custom_call.1} parent=1 // pred_check_branch
      %158 = sbr.rel (0) target = $region49
    $region48: #{tpu_custom_call.1} parent=1 // pred_region
      %160 = dma.done [#allocation12], 128
    $region49: #{tpu_custom_call.1} parent=1 // pred_fallthru
      _
    %161 = vsyncpa [#allocation6], 1
    %162 = vsyncpa [#allocation9], 1
    %163 = vsyncpa [#allocation7], 1
    %164 = vsyncpa [#allocation12], 1

</llo_original>
